<compile_context>
chip_gen: v5e
topology: v5e:2x2
jax: 0.10.0
libtpu: 0.0.40
codegen_flags: <defaults>
</compile_context>

<pallas_src>
import jax
import jax.numpy as jnp
from jax.experimental import pallas as pl
from jax.experimental.pallas import tpu as pltpu

GAMMA = 2.0   # hard-wired as an explicit square in the kernel
ALPHA = 0.25
BETA = 0.75


def _pwcfl_kernel(n_ref, logits_ref, target_ref, out_ref):
    """One lane-dense tile of per-sample weighted focal loss.

    n_ref:      (1,) int32 scalar-prefetch (SMEM) -- true sample count.
    logits_ref: (C, TILE_N) input dtype (f32 or bf16), samples on lanes.
    target_ref: (1, TILE_N) int32 class indices.
    out_ref:    (1, TILE_N) f32 per-sample weighted focal term.
    """
    x = logits_ref[...].astype(jnp.float32)           # in-vreg upcast
    tgt = target_ref[...]                              # (1, TILE_N) i32

    # Numerically-stable log-softmax pieces; all reductions run over the
    # class (sublane) axis, everything stays lane-dense over samples.
    m = jnp.max(x, axis=0, keepdims=True)              # (1, TILE_N)
    shifted = x - m
    exp_shifted = jnp.exp(shifted)                      # (C, TILE_N), EUP
    sum_exp = jnp.sum(exp_shifted, axis=0, keepdims=True)

    cls = jax.lax.broadcasted_iota(jnp.int32, x.shape, 0)
    hit = cls == tgt                                    # one-hot over classes
    picked_shifted = jnp.sum(jnp.where(hit, shifted, 0.0),
                             axis=0, keepdims=True)     # (1, TILE_N)
    picked_exp = jnp.sum(jnp.where(hit, exp_shifted, 0.0),
                         axis=0, keepdims=True)         # (1, TILE_N)

    ce = jnp.log(sum_exp) - picked_shifted              # cross-entropy
    # pt reuses the softmax exponentials (no extra EUP exp for exp(-ce)).
    pt = picked_exp / sum_exp
    one_m_pt = jnp.maximum(1.0 - pt, 0.0)               # pt may round > 1
    focal = one_m_pt * one_m_pt * ce                     # gamma == 2

    # Partial weighting: alpha where target == 0, beta otherwise.
    w = jnp.where(tgt == 0, ALPHA, BETA).astype(jnp.float32)
    loss = w * focal                                      # (1, TILE_N)

    i = pl.program_id(0)
    last = pl.num_programs(0) - 1

    @pl.when(i < last)
    def _():
        # Full interior tile: single unmasked lane-dense store.
        out_ref[...] = loss

    @pl.when(i == last)
    def _():
        # Ragged last tile: zero lanes past the true sample count so that any
        # garbage read from the clipped input block never reaches the sum.
        tile_n = out_ref.shape[-1]
        lane = jax.lax.broadcasted_iota(jnp.int32, (1, tile_n), 1)
        valid = (i * tile_n + lane) < n_ref[0]
        out_ref[...] = jnp.where(valid, loss, 0.0)


def _pick_tile_n(n, c, block_bytes=2 * 1024 * 1024):
    """Pick the lane tile so the f32 working set per step is ~block_bytes."""
    tile = block_bytes // max(c * 4, 4)               # sized off f32 copies
    tile = max(128, (tile // 128) * 128)              # lane-aligned
    n_up = ((n + 127) // 128) * 128
    tile = min(tile, n_up)                            # never bigger than batch
    # If the whole batch fits one tile, split it so the "parallel" grid axis
    # can feed both TensorCores on v7x.
    if tile >= n_up and n_up >= 2 * 128:
        tile = max(128, ((n_up // 2 + 127) // 128) * 128)
    return tile


def pwcfl_nonmask(logits, target, *, tile_n=None):
    """logits: (N, C) float (f32 or bf16), target: (N,) int -> scalar f32 loss."""
    n, c = logits.shape
    if tile_n is None:
        tile_n = _pick_tile_n(n, c)

    # Layout plumbing: samples -> 128-lane axis.  The transpose is one XLA
    # pass; the reshape of target is free.  No padding of N (ragged last tile
    # is masked in-kernel).
    logits_t = jnp.transpose(logits)                       # (C, N), keeps dtype
    tgt = target.astype(jnp.int32).reshape(1, n)           # (1, N)
    n_scalar = jnp.array([n], dtype=jnp.int32)             # scalar prefetch

    per_sample = pl.pallas_call(
        _pwcfl_kernel,
        out_shape=jax.ShapeDtypeStruct((1, n), jnp.float32),
        grid_spec=pltpu.PrefetchScalarGridSpec(
            num_scalar_prefetch=1,
            grid=(pl.cdiv(n, tile_n),),
            in_specs=[
                pl.BlockSpec((c, tile_n), lambda i, n_ref: (0, i)),
                pl.BlockSpec((1, tile_n), lambda i, n_ref: (0, i)),
            ],
            out_specs=pl.BlockSpec((1, tile_n), lambda i, n_ref: (0, i)),
        ),
        compiler_params=pltpu.CompilerParams(
            dimension_semantics=("parallel",),
            vmem_limit_bytes=32 * 1024 * 1024,
        ),
    )(n_scalar, logits_t, tgt)

    # Final mean over the true sample count (per-sample terms are lane-dense).
    return jnp.sum(per_sample) / n


def _reference(logits, target):
    # Pure-JAX reference mirroring the PyTorch forward.
    logits = logits.astype(jnp.float32)
    lse = jax.nn.logsumexp(logits, axis=-1)
    picked = jnp.take_along_axis(logits, target[:, None], axis=-1)[:, 0]
    ce = lse - picked
    pt = jnp.exp(-ce)
    focal = (1.0 - pt) ** GAMMA * ce
    w = jnp.where(target == 0, ALPHA, BETA)
    return jnp.mean(w * focal)


if __name__ == "__main__":
    key = jax.random.PRNGKey(0)
    k1, k2 = jax.random.split(key)
    N, C = 300, 16
    logits = jax.random.normal(k1, (N, C), dtype=jnp.float32) * 3.0
    target = jax.random.randint(k2, (N,), 0, C, dtype=jnp.int32)
    target = target.at[0].set(0)   # exercise the alpha branch

    ref = _reference(logits, target)

    # Default tiling (auto tile size, ragged last tile).
    loss = pwcfl_nonmask(logits, target)
    jax.block_until_ready(loss)
    assert jnp.allclose(loss, ref, rtol=1e-4, atol=1e-5), (loss, ref)

    # Explicit small tiles: multi-step grid + pl.when-masked last tile.
    loss_tiled = pwcfl_nonmask(logits, target, tile_n=128)
    jax.block_until_ready(loss_tiled)
    assert jnp.allclose(loss_tiled, ref, rtol=1e-4, atol=1e-5), (loss_tiled, ref)

    print("KERNEL_OK")
</pallas_src>

<mosaic_0001>
module attributes {stable_mosaic.version = 11 : i64} {
  func.func @_pwcfl_kernel(%arg0: i32, %arg1: memref<1xi32, #tpu.memory_space<smem>>, %arg2: memref<16x256xf32, #tpu.memory_space<vmem>>, %arg3: memref<1x256xi32, #tpu.memory_space<vmem>>, %arg4: memref<1x256xf32, #tpu.memory_space<vmem>>) attributes {dimension_semantics = [#tpu.dimension_semantics<parallel>], iteration_bounds = array<i64: 2>, scalar_prefetch = 1 : i64, scratch_operands = 0 : i64, tpu.core_type = #tpu.core_type<tc>, window_params = [{transform_indices = @transform_0, window_bounds = array<i64: 16, 256>}, {transform_indices = @transform_1, window_bounds = array<i64: 1, 256>}, {transform_indices = @transform_2, window_bounds = array<i64: 1, 256>}]} {
    %c0 = arith.constant 0 : index
    %c0_0 = arith.constant 0 : index
    %0 = vector.load %arg2[%c0, %c0_0] : memref<16x256xf32, #tpu.memory_space<vmem>>, vector<16x256xf32>
    %c0_1 = arith.constant 0 : index
    %c0_2 = arith.constant 0 : index
    %1 = vector.load %arg3[%c0_1, %c0_2] : memref<1x256xi32, #tpu.memory_space<vmem>>, vector<1x256xi32>
    %cst = arith.constant dense<0xFF800000> : vector<256xf32>
    %2 = vector.multi_reduction <maximumf>, %0, %cst [0] : vector<16x256xf32> to vector<256xf32>
    %3 = vector.shape_cast %2 : vector<256xf32> to vector<1x256xf32>
    %4 = vector.broadcast %3 : vector<1x256xf32> to vector<16x256xf32>
    %5 = arith.subf %0, %4 : vector<16x256xf32>
    %6 = math.exp %5 : vector<16x256xf32>
    %cst_3 = arith.constant dense<0.000000e+00> : vector<256xf32>
    %7 = vector.multi_reduction <add>, %6, %cst_3 [0] : vector<16x256xf32> to vector<256xf32>
    %8 = vector.shape_cast %7 : vector<256xf32> to vector<1x256xf32>
    %9 = tpu.iota {dimensions = array<i32: 0>} : vector<16x256xi32>
    %10 = vector.broadcast %1 : vector<1x256xi32> to vector<16x256xi32>
    %11 = arith.cmpi eq, %9, %10 : vector<16x256xi32>
    %cst_4 = arith.constant 0.000000e+00 : f32
    %12 = vector.broadcast %cst_4 : f32 to vector<16x256xf32>
    %13 = arith.select %11, %5, %12 : vector<16x256xi1>, vector<16x256xf32>
    %cst_5 = arith.constant dense<0.000000e+00> : vector<256xf32>
    %14 = vector.multi_reduction <add>, %13, %cst_5 [0] : vector<16x256xf32> to vector<256xf32>
    %15 = vector.shape_cast %14 : vector<256xf32> to vector<1x256xf32>
    %cst_6 = arith.constant 0.000000e+00 : f32
    %16 = vector.broadcast %cst_6 : f32 to vector<16x256xf32>
    %17 = arith.select %11, %6, %16 : vector<16x256xi1>, vector<16x256xf32>
    %cst_7 = arith.constant dense<0.000000e+00> : vector<256xf32>
    %18 = vector.multi_reduction <add>, %17, %cst_7 [0] : vector<16x256xf32> to vector<256xf32>
    %19 = vector.shape_cast %18 : vector<256xf32> to vector<1x256xf32>
    %20 = math.log %8 : vector<1x256xf32>
    %21 = arith.subf %20, %15 : vector<1x256xf32>
    %22 = arith.divf %19, %8 : vector<1x256xf32>
    %cst_8 = arith.constant 1.000000e+00 : f32
    %23 = vector.broadcast %cst_8 : f32 to vector<1x256xf32>
    %24 = arith.subf %23, %22 : vector<1x256xf32>
    %cst_9 = arith.constant 0.000000e+00 : f32
    %25 = vector.broadcast %cst_9 : f32 to vector<1x256xf32>
    %26 = arith.maximumf %24, %25 : vector<1x256xf32>
    %27 = arith.mulf %26, %26 : vector<1x256xf32>
    %28 = arith.mulf %27, %21 : vector<1x256xf32>
    %c0_i32 = arith.constant 0 : i32
    %29 = vector.broadcast %c0_i32 : i32 to vector<1x256xi32>
    %30 = arith.cmpi eq, %1, %29 : vector<1x256xi32>
    %cst_10 = arith.constant 2.500000e-01 : f32
    %cst_11 = arith.constant 7.500000e-01 : f32
    %31 = vector.broadcast %cst_10 : f32 to vector<1x256xf32>
    %32 = vector.broadcast %cst_11 : f32 to vector<1x256xf32>
    %33 = arith.select %30, %31, %32 : vector<1x256xi1>, vector<1x256xf32>
    %34 = arith.mulf %33, %28 : vector<1x256xf32>
    %c1_i32 = arith.constant 1 : i32
    %35 = arith.cmpi slt, %arg0, %c1_i32 : i32
    %36 = arith.extui %35 : i1 to i32
    %c0_i32_12 = arith.constant 0 : i32
    %37 = arith.cmpi ne, %36, %c0_i32_12 : i32
    scf.if %37 {
      %c0_15 = arith.constant 0 : index
      %c0_16 = arith.constant 0 : index
      %41 = vector.load %arg4[%c0_15, %c0_16] : memref<1x256xf32, #tpu.memory_space<vmem>>, vector<1x256xf32>
      tpu.vector_store %arg4[%c0_15, %c0_16], %34 {strides = array<i32>} : memref<1x256xf32, #tpu.memory_space<vmem>>, vector<1x256xf32>,
    } else {
    }
    %c1_i32_13 = arith.constant 1 : i32
    %38 = arith.cmpi eq, %arg0, %c1_i32_13 : i32
    %39 = arith.extui %38 : i1 to i32
    %c0_i32_14 = arith.constant 0 : i32
    %40 = arith.cmpi ne, %39, %c0_i32_14 : i32
    scf.if %40 {
      %41 = tpu.iota {dimensions = array<i32: 1>} : vector<1x256xi32>
      %c256_i32 = arith.constant 256 : i32
      %42 = arith.muli %arg0, %c256_i32 : i32
      %43 = vector.broadcast %42 : i32 to vector<1x256xi32>
      %44 = arith.addi %43, %41 : vector<1x256xi32>
      %c0_15 = arith.constant 0 : index
      %45 = memref.load %arg1[%c0_15] : memref<1xi32, #tpu.memory_space<smem>>
      %46 = vector.broadcast %45 : i32 to vector<1x256xi32>
      %47 = arith.cmpi slt, %44, %46 : vector<1x256xi32>
      %cst_16 = arith.constant 0.000000e+00 : f32
      %48 = vector.broadcast %cst_16 : f32 to vector<1x256xf32>
      %49 = arith.select %47, %34, %48 : vector<1x256xi1>, vector<1x256xf32>
      %c0_17 = arith.constant 0 : index
      %c0_18 = arith.constant 0 : index
      %50 = vector.load %arg4[%c0_17, %c0_18] : memref<1x256xf32, #tpu.memory_space<vmem>>, vector<1x256xf32>
      tpu.vector_store %arg4[%c0_17, %c0_18], %49 {strides = array<i32>} : memref<1x256xf32, #tpu.memory_space<vmem>>, vector<1x256xf32>,
    } else {
    }
    return
  }
  func.func @transform_0(%arg0: i32, %arg1: memref<1xi32, #tpu.memory_space<smem>>) -> (i32, i32) {
    %c0_i32 = arith.constant 0 : i32
    %c0_i32_0 = arith.constant 0 : i32
    return %c0_i32, %arg0 : i32, i32
  }
  func.func @transform_1(%arg0: i32, %arg1: memref<1xi32, #tpu.memory_space<smem>>) -> (i32, i32) {
    %c0_i32 = arith.constant 0 : i32
    %c0_i32_0 = arith.constant 0 : i32
    return %c0_i32, %arg0 : i32, i32
  }
  func.func @transform_2(%arg0: i32, %arg1: memref<1xi32, #tpu.memory_space<smem>>) -> (i32, i32) {
    %c0_i32 = arith.constant 0 : i32
    %c0_i32_0 = arith.constant 0 : i32
    return %c0_i32, %arg0 : i32, i32
  }
}

</mosaic_0001>

<llo_original>
// kernel: tpu_custom_call.1
$region0: #{tpu_custom_call.1}
  #allocation0 [shape = 'u32[]', space=smem, size = 0x4, offset = 0x4, fixed_abs, tag = 'smem constant byte address 0x4 - core index']
  #allocation1 [shape = 'u32[72,128]{1,0:T(1,128)}', space=vmem, size = 0x9000, scoped, tag = 'internal scratch']
  #allocation2 [shape = 's32[1]{0}', space=sflag, size = 0x4, scoped, tag = 'scoped memory for tpu_custom_call.1']
  #allocation3 [shape = 's32[1]{0:T(128)S(6)}', space=smem, size = 0x200, scoped, tag = 'prefetched SMEM operand 0']
  %s0 = inlined_call_operand.<no memory space> [shape: s32[1], index: 0, kind: input, shape index: {}]
  %s1 = inlined_call_operand.hbm [shape: f32[16,300], index: 1, kind: input, shape index: {}]
  %s2 = inlined_call_operand.hbm [shape: s32[1,300], index: 2, kind: input, shape index: {}]
  %s3 = inlined_call_operand.hbm [shape: f32[1,300], index: 3, kind: output, shape index: {}]
  %s4 = sld [smem:[#allocation0]]
  $region57: #{tpu_custom_call.1} parent=0
    _
  %s6 = ssub.s32 1, %s4
  %s7 = scalar_select 0, %s6, %s4
  %8 = sst [smem:[#allocation3]] %s0
  $region1: #{tpu_custom_call.1} parent=0
    #allocation4 [shape = 'u8[32768]{0}', space=vmem, size = 0x8000, scoped, tag = 'input window, operand 1']
    #allocation5 [shape = 's32[2]{0}', space=sflag, size = 0x8, scoped, tag = 'scoped memory for tpu_custom_call.1']
    #allocation6 [shape = 's32[2]{0}', space=sflag, size = 0x8, scoped, tag = 'scoped memory for tpu_custom_call.1']
    #allocation7 [shape = 'u8[2048]{0}', space=vmem, size = 0x800, scoped, tag = 'input window, operand 2']
    #allocation8 [shape = 's32[2]{0}', space=sflag, size = 0x8, scoped, tag = 'scoped memory for tpu_custom_call.1']
    #allocation9 [shape = 'u8[2048]{0}', space=vmem, size = 0x800, scoped, tag = 'output window, operand 0']
    %9 = vsyncpa [#allocation5], 0
    %s10 = scalar_lea.sflag [#allocation5], 1
    %11 = vsyncpa %s10, 0
    %12 = vsyncpa [#allocation8], 0
    %s13 = scalar_lea.sflag [#allocation8], 1
    %14 = vsyncpa %s13, 0
    %15 = vsyncpa [#allocation6], 0
    %s16 = scalar_lea.sflag [#allocation6], 1
    %17 = vsyncpa %s16, 0
    loop: start=0, step=1, limit=4
    $region2: #{tpu_custom_call.1} parent=1 // loop_pre_header
      _
    $region3: #{tpu_custom_call.1} parent=1 // loop_header
      %s19 = sphi 0, %s23
      %p20 = scmp.ge.s32.totalorder %s19, 4
      %s29 = sphi 0, %s31
      %s32 = sphi 0, %s29
      %s33 = sphi 0, %s32
      %s49 = sphi 0, %s33
      %s55 = sphi 0, %s57
      %s58 = sphi 0, %s55
      %s59 = sphi 0, %s58
      %s75 = sphi 0, %s59
      %s81 = sphi 0, %s83
      %s84 = sphi 0, %s81
      %s85 = sphi 0, %s84
      %s101 = sphi 0, %s85
    $region4: #{tpu_custom_call.1} parent=1 // loop_header_branch
      %22 = sbr.rel (%p20) target = $region8
    $region5: #{tpu_custom_call.1} parent=1 // loop_body
      %s24 = ssub.s32 %s19, 1
      %s25 = ssub.s32 %s19, 2
      %s26 = sadd.s32 %s19, 1
      %s27 = ssub.s32 %s19, %s26
      %p28 = scmp.eq.s32.totalorder %s27, 0
      %s30 = sadd.s32 %s29, 1
      %s31 = scalar_select %p28, %s29, %s30
      %p34 = pneg %p28
      %p35 = scmp.eq.s32.totalorder %s19, 1
      %p36 = por %p34, %p35
      %p37 = scmp.ne.s32.totalorder %s29, %s32
      %p38 = scmp.eq.s32.totalorder %s19, 0
      %p39 = por %p37, %p38
      %p40 = scmp.ne.s32.totalorder %s29, %s32
      %p41 = scmp.eq.s32.totalorder %s24, 1
      %p42 = por %p40, %p41
      %p43 = scmp.ne.s32.totalorder %s32, %s33
      %p44 = scmp.eq.s32.totalorder %s24, 0
      %p45 = por %p43, %p44
      %p46 = scmp.ne.s32.totalorder %s32, %s33
      %p47 = scmp.eq.s32.totalorder %s25, 1
      %p48 = por %p46, %p47
      %p50 = scmp.ne.s32.totalorder %s33, %s49
      %p51 = scmp.eq.s32.totalorder %s25, 0
      %p52 = por %p50, %p51
      %s53 = ssub.s32 %s19, %s26
      %p54 = scmp.eq.s32.totalorder %s53, 0
      %s56 = sadd.s32 %s55, 1
      %s57 = scalar_select %p54, %s55, %s56
      %p60 = pneg %p54
      %p61 = scmp.eq.s32.totalorder %s19, 1
      %p62 = por %p60, %p61
      %p63 = scmp.ne.s32.totalorder %s55, %s58
      %p64 = scmp.eq.s32.totalorder %s19, 0
      %p65 = por %p63, %p64
      %p66 = scmp.ne.s32.totalorder %s55, %s58
      %p67 = scmp.eq.s32.totalorder %s24, 1
      %p68 = por %p66, %p67
      %p69 = scmp.ne.s32.totalorder %s58, %s59
      %p70 = scmp.eq.s32.totalorder %s24, 0
      %p71 = por %p69, %p70
      %p72 = scmp.ne.s32.totalorder %s58, %s59
      %p73 = scmp.eq.s32.totalorder %s25, 1
      %p74 = por %p72, %p73
      %p76 = scmp.ne.s32.totalorder %s59, %s75
      %p77 = scmp.eq.s32.totalorder %s25, 0
      %p78 = por %p76, %p77
      %s79 = ssub.s32 %s19, %s26
      %p80 = scmp.eq.s32.totalorder %s79, 0
      %s82 = sadd.s32 %s81, 1
      %s83 = scalar_select %p80, %s81, %s82
      %p86 = pneg %p80
      %p87 = scmp.eq.s32.totalorder %s19, 1
      %p88 = por %p86, %p87
      %p89 = scmp.ne.s32.totalorder %s81, %s84
      %p90 = scmp.eq.s32.totalorder %s19, 0
      %p91 = por %p89, %p90
      %p92 = scmp.ne.s32.totalorder %s81, %s84
      %p93 = scmp.eq.s32.totalorder %s24, 1
      %p94 = por %p92, %p93
      %p95 = scmp.ne.s32.totalorder %s84, %s85
      %p96 = scmp.eq.s32.totalorder %s24, 0
      %p97 = por %p95, %p96
      %p98 = scmp.ne.s32.totalorder %s84, %s85
      %p99 = scmp.eq.s32.totalorder %s25, 1
      %p100 = por %p98, %p99
      %p102 = scmp.ne.s32.totalorder %s85, %s101
      %p103 = scmp.eq.s32.totalorder %s25, 0
      %p104 = por %p102, %p103
      %p105 = scmp.le.s32.totalorder 1, %s19
      %p106 = scmp.lt.s32.totalorder %s19, 3
      %p107 = pnand %p105, %p106
      %p108 = pneg %p107
      // Predicated region
      $region9: #{tpu_custom_call.1} parent=5 // pred_check
        _
      $region10: #{tpu_custom_call.1} parent=5 // pred_check_branch
        %110 = sbr.rel (%p107) target = $region12
      $region11: #{tpu_custom_call.1} parent=5 // pred_region
        %s111 = ssub.s32 %s19, 1
      $region12: #{tpu_custom_call.1} parent=5 // pred_fallthru
        _
      %p112 = scmp.lt.s32.totalorder %s19, 2
      // Predicated region
      $region13: #{tpu_custom_call.1} parent=5 // pred_check
        %p113 = pneg %p112
      $region14: #{tpu_custom_call.1} parent=5 // pred_check_branch
        %115 = sbr.rel (%p113) target = $region16
      $region15: #{tpu_custom_call.1} parent=5 // pred_region
        // Predicated region
        $region17: #{tpu_custom_call.1} parent=15 // pred_check
          %p116 = pneg %p39
        $region18: #{tpu_custom_call.1} parent=15 // pred_check_branch
          %118 = sbr.rel (%p116) target = $region20
        $region19: #{tpu_custom_call.1} parent=15 // pred_region
          %s119 = sand.u32 %s29, 1
          %s120 = scalar_lea.sflag [#allocation5], %s119
          %s121 = sand.u32 %s29, 1
          %s122 = smul.addr %s121, 32
          %s123 = scalar_lea.vmem [#allocation4], %s122
          %s124 = smul.u32 2, %s19
          %s125 = ssub.s32 3, %s124
          %p126 = scmp.lt.s32.totalorder %s125, 2
          %s127 = scalar_select %p126, %s125, 2
          %s128 = smul.u32 16, %s127
          %s129 = ssub.s32 32, %s128
          %s130 = sshll.u32 %s129, 4
          %131 = vsyncadd %s120, %s130
          %p132 = scmp.ne.s32.totalorder 0, %s128
          %s133 = smul.addr %s124, 8
          %s134 = scalar_lea.hbm %s1, %s133
          %s135 = smul.u32 %s127, 8
          %s136 = smul.u32 %s135, 2
          %s137 = sshll.u32 %s134, 4
          %s138 = int_to_ptr.hbm [resolvable:$true] %s137
          %s139 = sshll.u32 %s123, 4
          %s140 = int_to_ptr.vmem [resolvable:$true] %s139
          %s141 = sshll.u32 %s136, 4
          %145 = dma.hbm_to_vmem [thread:$0]  (%p132), %s138, %s141, %s140, %s120, 384, 256, %s135
        $region20: #{tpu_custom_call.1} parent=15 // pred_fallthru
          _
        // Predicated region
        $region21: #{tpu_custom_call.1} parent=15 // pred_check
          %p146 = pneg %p65
        $region22: #{tpu_custom_call.1} parent=15 // pred_check_branch
          %148 = sbr.rel (%p146) target = $region24
        $region23: #{tpu_custom_call.1} parent=15 // pred_region
          %s149 = sand.u32 %s55, 1
          %s150 = scalar_lea.sflag [#allocation8], %s149
          %s151 = sand.u32 %s55, 1
          %s152 = smul.addr %s151, 2
          %s153 = scalar_lea.vmem [#allocation7], %s152
          %s154 = smul.u32 2, %s19
          %s155 = ssub.s32 3, %s154
          %p156 = scmp.lt.s32.totalorder %s155, 2
          %s157 = scalar_select %p156, %s155, 2
          %s158 = ssub.s32 2, %s157
          %s159 = sshll.u32 %s158, 4
          %160 = vsyncadd %s150, %s159
          %p161 = scmp.ne.s32.totalorder 0, %s157
          %s162 = scalar_lea.hbm %s2, %s154
          %s163 = sshll.u32 %s157, 4
          %s164 = sshll.u32 %s162, 4
          %s165 = int_to_ptr.hbm [resolvable:$true] %s164
          %s166 = sshll.u32 %s153, 4
          %s167 = int_to_ptr.vmem [resolvable:$true] %s166
          %169 = dma.hbm_to_vmem [thread:$0]  (%p161), %s165, %s163, %s167, %s150
        $region24: #{tpu_custom_call.1} parent=15 // pred_fallthru
          _
      $region16: #{tpu_custom_call.1} parent=5 // pred_fallthru
        _
      %p170 = scmp.le.s32.totalorder 1, %s19
      %p171 = scmp.lt.s32.totalorder %s19, 3
      %p172 = pnand %p170, %p171
      %p173 = pneg %p172
      // Predicated region
      $region25: #{tpu_custom_call.1} parent=5 // pred_check
        _
      $region26: #{tpu_custom_call.1} parent=5 // pred_check_branch
        %175 = sbr.rel (%p172) target = $region28
      $region27: #{tpu_custom_call.1} parent=5 // pred_region
        %s176 = ssub.s32 %s19, 1
        %s177 = sand.u32 %s32, 1
        %s178 = scalar_lea.sflag [#allocation5], %s177
        %s179 = sand.u32 %s32, 1
        %s180 = smul.addr %s179, 32
        %s181 = scalar_lea.vmem [#allocation4], %s180
        // Predicated region
        $region29: #{tpu_custom_call.1} parent=27 // pred_check
          %p182 = pneg %p45
        $region30: #{tpu_custom_call.1} parent=27 // pred_check_branch
          %184 = sbr.rel (%p182) target = $region32
        $region31: #{tpu_custom_call.1} parent=27 // pred_region
          %186 = dma.done %s178, 512
        $region32: #{tpu_custom_call.1} parent=27 // pred_fallthru
          _
        %s187 = sand.u32 %s58, 1
        %s188 = scalar_lea.sflag [#allocation8], %s187
        %s189 = sand.u32 %s58, 1
        %s190 = smul.addr %s189, 2
        %s191 = scalar_lea.vmem [#allocation7], %s190
        // Predicated region
        $region33: #{tpu_custom_call.1} parent=27 // pred_check
          %p192 = pneg %p71
        $region34: #{tpu_custom_call.1} parent=27 // pred_check_branch
          %194 = sbr.rel (%p192) target = $region36
        $region35: #{tpu_custom_call.1} parent=27 // pred_region
          %196 = dma.done %s188, 32
        $region36: #{tpu_custom_call.1} parent=27 // pred_fallthru
          _
        %s197 = sand.u32 %s32, 1
        %s198 = scalar_lea.sflag [#allocation5], %s197
        %s199 = sand.u32 %s32, 1
        %s200 = smul.addr %s199, 32
        %s201 = scalar_lea.vmem [#allocation4], %s200
        %p202 = pneg %p45
        %p203 = pneg %p42
        %s204 = sand.u32 %s58, 1
        %s205 = scalar_lea.sflag [#allocation8], %s204
        %s206 = sand.u32 %s58, 1
        %s207 = smul.addr %s206, 2
        %s208 = scalar_lea.vmem [#allocation7], %s207
        %p209 = pneg %p71
        %p210 = pneg %p68
        %p211 = pneg %p97
        %p212 = pneg %p94
        %s213 = sand.u32 %s84, 1
        %s214 = scalar_lea.sflag [#allocation6], %s213
        %s215 = sand.u32 %s84, 1
        %s216 = smul.addr %s215, 2
        %s217 = scalar_lea.vmem [#allocation9], %s216
        %s218 = smul.u32 2, %s24
        %s219 = ssub.s32 3, %s218
        %p220 = scmp.lt.s32.totalorder %s219, 2
        %s221 = scalar_select %p220, %s219, 2
        %s222 = smul.u32 16, %s221
        %s223 = smul.u32 2, %s24
        %s224 = ssub.s32 3, %s223
        %p225 = scmp.lt.s32.totalorder %s224, 2
        %s226 = scalar_select %p225, %s224, 2
        %s227 = smul.u32 2, %s24
        %s228 = ssub.s32 3, %s227
        %p229 = scmp.lt.s32.totalorder %s228, 2
        %s230 = scalar_select %p229, %s228, 2
        %v231 = vld [vmem:[%s181] sm:$0xff]
        %v232 = vld [vmem:[%s181 + $0x8] sm:$0xff]
        %v233 = vld [vmem:[%s181 + $0x10] sm:$0xff]
        %v234 = vld [vmem:[%s181 + $0x18] sm:$0xff]
        %v235 = vld [vmem:[%s191] sm:$0x3]
        %v236 = vmax.f32 %v231, %v233
        %v237 = vrot.slane %v236, 4
        %v238 = vmax.f32 %v236, %v237
        %v239 = vrot.slane %v238, 2
        %v240 = vmax.f32 %v238, %v239
        %v241 = vrot.slane %v240, 1
        %v242 = vmax.f32 %v240, %v241
        %v243 = vmax.f32 %v232, %v234
        %v244 = vrot.slane %v243, 4
        %v245 = vmax.f32 %v243, %v244
        %v246 = vrot.slane %v245, 2
        %v247 = vmax.f32 %v245, %v246
        %v248 = vrot.slane %v247, 1
        %v249 = vmax.f32 %v247, %v248
        %v250 = vsub.f32 %v231, %v242
        %v251 = vsub.f32 %v232, %v249
        %v252 = vsub.f32 %v233, %v242
        %v253 = vsub.f32 %v234, %v249
        %v254 = vmul.f32 %v250, 1.442695
        %v255 = vpow.pop %v254
        %v256 = vmul.f32 %v251, 1.442695
        %v257 = vpow.pop %v256
        %v258 = vmul.f32 %v252, 1.442695
        %v259 = vpow.pop %v258
        %v260 = vmul.f32 %v253, 1.442695
        %v261 = vpow.pop %v260
        %v262 = vadd.f32 %v255, %v259
        %v263 = vrot.slane %v262, 4
        %v264 = vadd.f32 %v262, %v263
        %v265 = vrot.slane %v264, 2
        %v266 = vadd.f32 %v264, %v265
        %v267 = vrot.slane %v266, 1
        %v268 = vadd.f32 %v266, %v267
        %v269 = vadd.f32 %v257, %v261
        %v270 = vrot.slane %v269, 4
        %v271 = vadd.f32 %v269, %v270
        %v272 = vrot.slane %v271, 2
        %v273 = vadd.f32 %v271, %v272
        %v274 = vrot.slane %v273, 1
        %v275 = vadd.f32 %v273, %v274
        %v276 = vlaneseq
        %v277 = vshrl.u32 %v276, 7
        %v278 = vadd.s32 %v277, 8
        %v279 = vperm.slane %v235, 0
        %v280 = vperm.slane %v235, 1
        %vm281 = vcmp.eq.s32.totalorder %v277, %v279
        %vm282 = vcmp.eq.s32.totalorder %v277, %v280
        %vm283 = vcmp.eq.s32.totalorder %v278, %v279
        %vm284 = vcmp.eq.s32.totalorder %v278, %v280
        %v285 = vsel %vm281, %v250, 0.0
        %v286 = vsel %vm282, %v251, 0.0
        %v287 = vsel %vm283, %v252, 0.0
        %v288 = vsel %vm284, %v253, 0.0
        %v289 = vadd.f32 %v285, %v287
        %v290 = vrot.slane %v289, 4
        %v291 = vadd.f32 %v289, %v290
        %v292 = vrot.slane %v291, 2
        %v293 = vadd.f32 %v291, %v292
        %v294 = vrot.slane %v293, 1
        %v295 = vadd.f32 %v293, %v294
        %v296 = vadd.f32 %v286, %v288
        %v297 = vrot.slane %v296, 4
        %v298 = vadd.f32 %v296, %v297
        %v299 = vrot.slane %v298, 2
        %v300 = vadd.f32 %v298, %v299
        %v301 = vrot.slane %v300, 1
        %v302 = vadd.f32 %v300, %v301
        %v303 = vsel %vm281, %v255, 0.0
        %v304 = vsel %vm282, %v257, 0.0
        %v305 = vsel %vm283, %v259, 0.0
        %v306 = vsel %vm284, %v261, 0.0
        %v307 = vadd.f32 %v303, %v305
        %v308 = vrot.slane %v307, 4
        %v309 = vadd.f32 %v307, %v308
        %v310 = vrot.slane %v309, 2
        %v311 = vadd.f32 %v309, %v310
        %v312 = vrot.slane %v311, 1
        %v313 = vadd.f32 %v311, %v312
        %v314 = vadd.f32 %v304, %v306
        %v315 = vrot.slane %v314, 4
        %v316 = vadd.f32 %v314, %v315
        %v317 = vrot.slane %v316, 2
        %v318 = vadd.f32 %v316, %v317
        %v319 = vrot.slane %v318, 1
        %v320 = vadd.f32 %v318, %v319
        %v321 = vlog2.pop %v268
        %v322 = vmul.f32 %v321, 0.6931472
        %v323 = vlog2.pop %v275
        %v324 = vmul.f32 %v323, 0.6931472
        %v325 = vsub.f32 %v322, %v295
        %v326 = vsub.f32 %v324, %v302
        %v327 = vrcp.pop %v268
        %v328 = vmul.f32 %v268, %v327
        %v329 = vsub.f32 1.0, %v328
        %v330 = vmul.f32 %v327, %v329
        %v331 = vadd.f32 %v327, %v330
        %vm332 = vweird.f32 %v268
        %vm333 = vweird.f32 %v327
        %vm334 = vmor %vm332, %vm333
        %v335 = vsel %vm334, %v327, %v331
        %v336 = vand.u32 2147483647, %v268
        %vm337 = vcmp.eq.f32.partialorder %v336, 8.507059e+37
        %v338 = vand.u32 %v268, 2147483648
        %v339 = vor.u32 1.1754944e-38, %v338
        %v340 = vsel %vm337, %v339, %v335
        %v341 = vmul.f32 %v313, %v340
        %v342 = vrcp.pop %v275
        %v343 = vmul.f32 %v275, %v342
        %v344 = vsub.f32 1.0, %v343
        %v345 = vmul.f32 %v342, %v344
        %v346 = vadd.f32 %v342, %v345
        %vm347 = vweird.f32 %v275
        %vm348 = vweird.f32 %v342
        %vm349 = vmor %vm347, %vm348
        %v350 = vsel %vm349, %v342, %v346
        %v351 = vand.u32 2147483647, %v275
        %vm352 = vcmp.eq.f32.partialorder %v351, 8.507059e+37
        %v353 = vand.u32 %v275, 2147483648
        %v354 = vor.u32 1.1754944e-38, %v353
        %v355 = vsel %vm352, %v354, %v350
        %v356 = vmul.f32 %v320, %v355
        %v357 = vsub.f32 1.0, %v341
        %v358 = vsub.f32 1.0, %v356
        %v359 = vmax.f32 %v357, 0.0
        %v360 = vmax.f32 %v358, 0.0
        %v361 = vmul.f32 %v359, %v359
        %v362 = vmul.f32 %v360, %v360
        %v363 = vmul.f32 %v361, %v325
        %v364 = vmul.f32 %v362, %v326
        %vm365 = vcmp.eq.s32.totalorder %v235, 0
        %v366 = vsel %vm365, 0.25, 0.75
        %v369 = vrot.slane %v364, 7
        %vm370 = vcmask 1040384
        %v371 = vsel %vm370, %v363, %v369
        %v373 = vmul.f32 %v366, %v371
        %p374 = scmp.lt.s32.totalorder %s24, 1
        // Predicated region
        $region37: #{tpu_custom_call.1} parent=27 // pred_check
          %p375 = pneg %p374
        $region38: #{tpu_custom_call.1} parent=27 // pred_check_branch
          %377 = sbr.rel (%p375) target = $region40
        $region39: #{tpu_custom_call.1} parent=27 // pred_region
          %v378 = vlaneseq
          %vm379 = vcmp.ge.s32.totalorder %v378, 0
          %vm380 = vcmp.lt.s32.totalorder %v378, 256
          %vm381 = vmand %vm379, %vm380
          %382 = vst.msk [vmem:[%s217] sm:$0x3] %vm381, %v373
        $region40: #{tpu_custom_call.1} parent=27 // pred_fallthru
          _
        %p383 = scmp.eq.s32.totalorder %s24, 1
        // Predicated region
        $region41: #{tpu_custom_call.1} parent=27 // pred_check
          %p384 = pneg %p383
        $region42: #{tpu_custom_call.1} parent=27 // pred_check_branch
          %386 = sbr.rel (%p384) target = $region44
        $region43: #{tpu_custom_call.1} parent=27 // pred_region
          %v387 = vlaneseq
          %v388 = vand.u32 %v387, 127
          %v389 = vadd.s32 %v388, 128
          %s390 = smul.u32 %s24, 256
          %v391 = vstv %s390
          %v392 = vadd.s32 %v391, %v388
          %v393 = vadd.s32 %v391, %v389
          %s394 = sld [smem:[#allocation3]]
          %v395 = vstv %s394
          %vm396 = vcmp.lt.s32.totalorder %v392, %v395
          %vm397 = vcmp.lt.s32.totalorder %v393, %v395
          %v399 = vperm.slane %v373, 0
          %v400 = vperm.slane %v373, 1
          %v403 = vsel %vm396, %v399, 0.0
          %v404 = vsel %vm397, %v400, 0.0
          %v407 = vrot.slane %v404, 7
          %v408 = vsel %vm370, %v403, %v407
          %v410 = vlaneseq
          %vm411 = vcmp.ge.s32.totalorder %v410, 0
          %vm412 = vcmp.lt.s32.totalorder %v410, 256
          %vm413 = vmand %vm411, %vm412
          %414 = vst.msk [vmem:[%s217] sm:$0x3] %vm413, %v408
        $region44: #{tpu_custom_call.1} parent=27 // pred_fallthru
          _
        %s415 = sand.u32 %s84, 1
        %s416 = scalar_lea.sflag [#allocation6], %s415
        %s417 = sand.u32 %s84, 1
        %s418 = smul.addr %s417, 2
        %s419 = scalar_lea.vmem [#allocation9], %s418
        // Predicated region
        $region45: #{tpu_custom_call.1} parent=27 // pred_check
          %p420 = pneg %p94
        $region46: #{tpu_custom_call.1} parent=27 // pred_check_branch
          %422 = sbr.rel (%p420) target = $region48
        $region47: #{tpu_custom_call.1} parent=27 // pred_region
          %s423 = smul.u32 2, %s24
          %s424 = ssub.s32 3, %s423
          %p425 = scmp.lt.s32.totalorder %s424, 2
          %s426 = scalar_select %p425, %s424, 2
          %s427 = ssub.s32 2, %s426
          %s428 = sshll.u32 %s427, 4
          %429 = vsyncadd %s416, %s428
          %p430 = scmp.ne.s32.totalorder 0, %s426
          %s431 = scalar_lea.hbm %s3, %s423
          %s432 = sshll.u32 %s426, 4
          %s433 = sshll.u32 %s419, 4
          %s434 = int_to_ptr.vmem [resolvable:$true] %s433
          %s435 = sshll.u32 %s431, 4
          %s436 = int_to_ptr.hbm [resolvable:$true] %s435
          %438 = dma.vmem_to_hbm [thread:$0]  (%p430), %s434, %s432, %s436, %s416
        $region48: #{tpu_custom_call.1} parent=27 // pred_fallthru
          _
      $region28: #{tpu_custom_call.1} parent=5 // pred_fallthru
        _
      %p439 = scmp.le.s32.totalorder 2, %s19
      // Predicated region
      $region49: #{tpu_custom_call.1} parent=5 // pred_check
        %p440 = pneg %p439
      $region50: #{tpu_custom_call.1} parent=5 // pred_check_branch
        %442 = sbr.rel (%p440) target = $region52
      $region51: #{tpu_custom_call.1} parent=5 // pred_region
        %s443 = ssub.s32 %s19, 2
        // Predicated region
        $region53: #{tpu_custom_call.1} parent=51 // pred_check
          %p444 = pneg %p100
        $region54: #{tpu_custom_call.1} parent=51 // pred_check_branch
          %446 = sbr.rel (%p444) target = $region56
        $region55: #{tpu_custom_call.1} parent=51 // pred_region
          %s447 = sand.u32 %s85, 1
          %s448 = scalar_lea.sflag [#allocation6], %s447
          %s449 = sand.u32 %s85, 1
          %s450 = smul.addr %s449, 2
          %s451 = scalar_lea.vmem [#allocation9], %s450
          %453 = dma.done %s448, 32
        $region56: #{tpu_custom_call.1} parent=51 // pred_fallthru
          _
      $region52: #{tpu_custom_call.1} parent=5 // pred_fallthru
        _
    $region6: #{tpu_custom_call.1} parent=1 // loop_footer
      %s23 = sadd.s32 1, %s19
    $region7: #{tpu_custom_call.1} parent=1 // loop_footer_branch
      %18 = sbr.rel target = $region3
    $region8: #{tpu_custom_call.1} parent=1 // loop_exit
      _
    %454 = vsyncpa [#allocation5], 1
    %s455 = scalar_lea.sflag [#allocation5], 1
    %456 = vsyncpa %s455, 1
    %457 = vsyncpa [#allocation8], 1
    %s458 = scalar_lea.sflag [#allocation8], 1
    %459 = vsyncpa %s458, 1
    %460 = vsyncpa [#allocation6], 1
    %s461 = scalar_lea.sflag [#allocation6], 1
    %462 = vsyncpa %s461, 1

</llo_original>
